<compile_context>
chip_gen: v6e
topology: v6e:2x2x1
jax: 0.10.0
libtpu: 0.0.40
codegen_flags: <defaults>
</compile_context>

<pallas_src>
import jax
import jax.numpy as jnp
from jax.experimental import pallas as pl
from jax.experimental.pallas import tpu as pltpu

EPS = 1e-5  # nn.LayerNorm default


def _round_up(a, b):
    return (a + b - 1) // b * b


def prenorm_linear_kernel(x_ref, g_ref, b_ref, w_ref, bias_ref, o_ref):
    # x_ref: (TM, D)  g_ref/b_ref: (1, D)  w_ref: (D, TN)  bias_ref: (1, TN)
    x = x_ref[...].astype(jnp.float32)
    d = x.shape[-1]
    inv_d = jnp.float32(1.0 / d)

    # --- LayerNorm over last dim: single-pass stats (one XLU reduction pair) ---
    s1 = jnp.sum(x, axis=-1, keepdims=True)
    s2 = jnp.sum(x * x, axis=-1, keepdims=True)
    mean = s1 * inv_d
    var = jnp.maximum(s2 * inv_d - mean * mean, 0.0)  # biased variance (torch)
    xhat = (x - mean) * jax.lax.rsqrt(var + EPS)

    # Affine params hoisted / read once per grid step, in f32 on the VPU.
    g = g_ref[...].astype(jnp.float32)
    b = b_ref[...].astype(jnp.float32)
    y = xhat * g + b

    # --- fn = Linear(dim, hidden): MXU matmul in the weight's native dtype ---
    out = jnp.dot(y.astype(w_ref.dtype), w_ref[...],
                  preferred_element_type=jnp.float32)
    out = out + bias_ref[...].astype(jnp.float32)
    o_ref[...] = out.astype(o_ref.dtype)


def prenorm_linear(x, gamma, beta, w, bias, *, block_rows=256, block_cols=512):
    """x: (B, S, D) -> (B, S, H).  LayerNorm over D, then Linear(D, H)."""
    B, S, D = x.shape
    H = w.shape[1]
    N = B * S

    # ---- tile sizing ----
    TM = min(block_rows, _round_up(N, 16))        # token tile (mult of 16)
    Np = _round_up(N, TM)
    Hp0 = _round_up(H, 128)                       # lane-dense output features
    TN = min(block_cols, Hp0)                     # feature tile (mult of 128)
    Hp = _round_up(Hp0, TN)

    # ---- wrapper-side padding (zeros; sliced off afterwards) ----
    xf = x.reshape(N, D)
    if Np != N:
        xf = jnp.pad(xf, ((0, Np - N), (0, 0)))
    wp = w if Hp == H else jnp.pad(w, ((0, 0), (0, Hp - H)))
    biasp = bias if Hp == H else jnp.pad(bias, ((0, 0), (0, Hp - H)))

    # ---- VMEM budget (double-buffered pipelined operands) + headroom ----
    est = 2 * (TM * D * xf.dtype.itemsize
               + D * TN * wp.dtype.itemsize
               + TN * biasp.dtype.itemsize
               + TM * TN * x.dtype.itemsize) \
        + 2 * 2 * D * gamma.dtype.itemsize
    vmem_limit = int(min(max(2 * est, 32 << 20), 64 << 20))

    grid = (Np // TM, Hp // TN)

    out = pl.pallas_call(
        prenorm_linear_kernel,
        out_shape=jax.ShapeDtypeStruct((Np, Hp), x.dtype),
        grid_spec=pltpu.PrefetchScalarGridSpec(
            num_scalar_prefetch=0,
            grid=grid,
            in_specs=[
                pl.BlockSpec((TM, D), lambda i, j: (i, 0)),   # x row tile
                pl.BlockSpec((1, D), lambda i, j: (0, 0)),    # gamma (resident)
                pl.BlockSpec((1, D), lambda i, j: (0, 0)),    # beta  (resident)
                pl.BlockSpec((D, TN), lambda i, j: (0, j)),   # weight col tile
                pl.BlockSpec((1, TN), lambda i, j: (0, j)),   # bias col tile
            ],
            out_specs=pl.BlockSpec((TM, TN), lambda i, j: (i, j)),
        ),
        compiler_params=pltpu.CompilerParams(
            dimension_semantics=("parallel", "parallel"),
            vmem_limit_bytes=vmem_limit),
    )(xf, gamma, beta, wp, biasp)

    return out[:N, :H].reshape(B, S, H)


def reference(x, gamma, beta, w, bias):
    """Pure-JAX f32 reference: LayerNorm(D) then Linear(D, H)."""
    xf = x.astype(jnp.float32)
    mean = jnp.mean(xf, axis=-1, keepdims=True)
    var = jnp.mean((xf - mean) ** 2, axis=-1, keepdims=True)
    xhat = (xf - mean) / jnp.sqrt(var + EPS)
    y = xhat * gamma[0].astype(jnp.float32) + beta[0].astype(jnp.float32)
    return y @ w.astype(jnp.float32) + bias[0].astype(jnp.float32)


if __name__ == "__main__":
    key = jax.random.PRNGKey(0)
    B, S, D, H = 2, 8, 32, 64

    kx, kw, kb = jax.random.split(key, 3)
    x = jax.random.normal(kx, (B, S, D), dtype=jnp.float32)

    # Deterministic parameter init (synthetic, not a checkpoint load).
    gamma = jnp.ones((1, D), dtype=jnp.float32)    # nn.LayerNorm weight init
    beta = jnp.zeros((1, D), dtype=jnp.float32)    # nn.LayerNorm bias init
    w = jax.random.normal(kw, (D, H), dtype=jnp.float32) * 0.02
    bias = jax.random.normal(kb, (1, H), dtype=jnp.float32) * 0.02

    # --- f32 path ---
    out = prenorm_linear(x, gamma, beta, w, bias)
    out = jax.block_until_ready(out)
    ref = reference(x, gamma, beta, w, bias)
    assert out.shape == (B, S, H)
    assert jnp.max(jnp.abs(out.astype(jnp.float32) - ref)) < 1e-4

    # --- bf16 weights/activations path (bf16 MXU, f32 accumulation) ---
    xb = x.astype(jnp.bfloat16)
    wb = w.astype(jnp.bfloat16)
    biasb = bias.astype(jnp.bfloat16)
    out_b = prenorm_linear(xb, gamma, beta, wb, biasb)
    out_b = jax.block_until_ready(out_b)
    ref_b = reference(xb, gamma, beta, wb, biasb)
    assert out_b.shape == (B, S, H)
    assert jnp.max(jnp.abs(out_b.astype(jnp.float32) - ref_b)) < 5e-2

    print("KERNEL_OK")
</pallas_src>

<mosaic_0001>
module attributes {stable_mosaic.version = 11 : i64} {
  func.func @prenorm_linear_kernel(%arg0: i32, %arg1: i32, %arg2: memref<16x32xf32, #tpu.memory_space<vmem>>, %arg3: memref<1x32xf32, #tpu.memory_space<vmem>>, %arg4: memref<1x32xf32, #tpu.memory_space<vmem>>, %arg5: memref<32x128xf32, #tpu.memory_space<vmem>>, %arg6: memref<1x128xf32, #tpu.memory_space<vmem>>, %arg7: memref<16x128xf32, #tpu.memory_space<vmem>>) attributes {dimension_semantics = [#tpu.dimension_semantics<parallel>, #tpu.dimension_semantics<parallel>], iteration_bounds = array<i64: 1, 1>, scalar_prefetch = 0 : i64, scratch_operands = 0 : i64, tpu.core_type = #tpu.core_type<tc>, window_params = [{transform_indices = @transform_0, window_bounds = array<i64: 16, 32>}, {pipeline_mode = #tpu.pipeline_mode<synchronous>, transform_indices = @transform_1, window_bounds = array<i64: 1, 32>}, {pipeline_mode = #tpu.pipeline_mode<synchronous>, transform_indices = @transform_2, window_bounds = array<i64: 1, 32>}, {transform_indices = @transform_3, window_bounds = array<i64: 32, 128>}, {transform_indices = @transform_4, window_bounds = array<i64: 1, 128>}, {transform_indices = @transform_5, window_bounds = array<i64: 16, 128>}]} {
    %c0 = arith.constant 0 : index
    %c0_0 = arith.constant 0 : index
    %0 = vector.load %arg2[%c0, %c0_0] : memref<16x32xf32, #tpu.memory_space<vmem>>, vector<16x32xf32>
    %cst = arith.constant dense<0.000000e+00> : vector<16xf32>
    %1 = vector.multi_reduction <add>, %0, %cst [1] : vector<16x32xf32> to vector<16xf32>
    %2 = vector.shape_cast %1 : vector<16xf32> to vector<16x1xf32>
    %3 = arith.mulf %0, %0 : vector<16x32xf32>
    %cst_1 = arith.constant dense<0.000000e+00> : vector<16xf32>
    %4 = vector.multi_reduction <add>, %3, %cst_1 [1] : vector<16x32xf32> to vector<16xf32>
    %5 = vector.shape_cast %4 : vector<16xf32> to vector<16x1xf32>
    %cst_2 = arith.constant 3.125000e-02 : f32
    %6 = vector.broadcast %cst_2 : f32 to vector<16x1xf32>
    %7 = arith.mulf %2, %6 : vector<16x1xf32>
    %cst_3 = arith.constant 3.125000e-02 : f32
    %8 = vector.broadcast %cst_3 : f32 to vector<16x1xf32>
    %9 = arith.mulf %5, %8 : vector<16x1xf32>
    %10 = arith.mulf %7, %7 : vector<16x1xf32>
    %11 = arith.subf %9, %10 : vector<16x1xf32>
    %cst_4 = arith.constant 0.000000e+00 : f32
    %12 = vector.broadcast %cst_4 : f32 to vector<16x1xf32>
    %13 = arith.maximumf %11, %12 : vector<16x1xf32>
    %14 = vector.broadcast %7 : vector<16x1xf32> to vector<16x32xf32>
    %15 = arith.subf %0, %14 : vector<16x32xf32>
    %cst_5 = arith.constant 9.99999974E-6 : f32
    %16 = vector.broadcast %cst_5 : f32 to vector<16x1xf32>
    %17 = arith.addf %13, %16 : vector<16x1xf32>
    %18 = math.rsqrt %17 : vector<16x1xf32>
    %19 = vector.broadcast %18 : vector<16x1xf32> to vector<16x32xf32>
    %20 = arith.mulf %15, %19 : vector<16x32xf32>
    %c0_6 = arith.constant 0 : index
    %c0_7 = arith.constant 0 : index
    %21 = vector.load %arg3[%c0_6, %c0_7] : memref<1x32xf32, #tpu.memory_space<vmem>>, vector<1x32xf32>
    %c0_8 = arith.constant 0 : index
    %c0_9 = arith.constant 0 : index
    %22 = vector.load %arg4[%c0_8, %c0_9] : memref<1x32xf32, #tpu.memory_space<vmem>>, vector<1x32xf32>
    %23 = vector.broadcast %21 : vector<1x32xf32> to vector<16x32xf32>
    %24 = arith.mulf %20, %23 : vector<16x32xf32>
    %25 = vector.broadcast %22 : vector<1x32xf32> to vector<16x32xf32>
    %26 = arith.addf %24, %25 : vector<16x32xf32>
    %c0_10 = arith.constant 0 : index
    %c0_11 = arith.constant 0 : index
    %27 = vector.load %arg5[%c0_10, %c0_11] : memref<32x128xf32, #tpu.memory_space<vmem>>, vector<32x128xf32>
    %cst_12 = arith.constant dense<0.000000e+00> : vector<16x128xf32>
    %28 = tpu.matmul %26, %27, %cst_12 {dimension_numbers = #tpu.dot_dimension_numbers<[1], [0], [0], [1], [0, 0, 1, 1], [], []>} : vector<16x32xf32>, vector<32x128xf32>, vector<16x128xf32> -> vector<16x128xf32>
    %c0_13 = arith.constant 0 : index
    %c0_14 = arith.constant 0 : index
    %29 = vector.load %arg6[%c0_13, %c0_14] : memref<1x128xf32, #tpu.memory_space<vmem>>, vector<1x128xf32>
    %30 = vector.broadcast %29 : vector<1x128xf32> to vector<16x128xf32>
    %31 = arith.addf %28, %30 : vector<16x128xf32>
    %c0_15 = arith.constant 0 : index
    %c0_16 = arith.constant 0 : index
    %32 = vector.load %arg7[%c0_15, %c0_16] : memref<16x128xf32, #tpu.memory_space<vmem>>, vector<16x128xf32>
    tpu.vector_store %arg7[%c0_15, %c0_16], %31 {strides = array<i32>} : memref<16x128xf32, #tpu.memory_space<vmem>>, vector<16x128xf32>,
    return
  }
  func.func @transform_0(%arg0: i32, %arg1: i32) -> (i32, i32) {
    %c0_i32 = arith.constant 0 : i32
    %c0_i32_0 = arith.constant 0 : i32
    return %arg0, %c0_i32 : i32, i32
  }
  func.func @transform_1(%arg0: i32, %arg1: i32) -> (i32, i32) {
    %c0_i32 = arith.constant 0 : i32
    %c0_i32_0 = arith.constant 0 : i32
    %c0_i32_1 = arith.constant 0 : i32
    return %c0_i32, %c0_i32_0 : i32, i32
  }
  func.func @transform_2(%arg0: i32, %arg1: i32) -> (i32, i32) {
    %c0_i32 = arith.constant 0 : i32
    %c0_i32_0 = arith.constant 0 : i32
    %c0_i32_1 = arith.constant 0 : i32
    return %c0_i32, %c0_i32_0 : i32, i32
  }
  func.func @transform_3(%arg0: i32, %arg1: i32) -> (i32, i32) {
    %c0_i32 = arith.constant 0 : i32
    %c0_i32_0 = arith.constant 0 : i32
    return %c0_i32, %arg1 : i32, i32
  }
  func.func @transform_4(%arg0: i32, %arg1: i32) -> (i32, i32) {
    %c0_i32 = arith.constant 0 : i32
    %c0_i32_0 = arith.constant 0 : i32
    return %c0_i32, %arg1 : i32, i32
  }
  func.func @transform_5(%arg0: i32, %arg1: i32) -> (i32, i32) {
    %c0_i32 = arith.constant 0 : i32
    return %arg0, %arg1 : i32, i32
  }
}

</mosaic_0001>

<llo_original>
// kernel: tpu_custom_call.1
$region0: #{tpu_custom_call.1}
  #allocation0 [shape = 'u32[]', space=smem, size = 0x4, offset = 0x4, fixed_abs, tag = 'smem constant byte address 0x4 - core index']
  #allocation1 [shape = 'u32[144,128]{1,0:T(1,128)}', space=vmem, size = 0x12000, scoped, tag = 'internal scratch']
  %s0 = inlined_call_operand.hbm [shape: f32[16,32], index: 0, kind: input, shape index: {}]
  %s1 = inlined_call_operand.vmem [shape: f32[1,32], index: 1, kind: input, shape index: {}]
  %s2 = inlined_call_operand.vmem [shape: f32[1,32], index: 2, kind: input, shape index: {}]
  %s3 = inlined_call_operand.hbm [shape: f32[32,128], index: 3, kind: input, shape index: {}]
  %s4 = inlined_call_operand.vmem [shape: f32[1,128], index: 4, kind: input, shape index: {}]
  %s5 = inlined_call_operand.hbm [shape: f32[16,128], index: 5, kind: output, shape index: {}]
  %s6 = sld [smem:[#allocation0]]
  $region38: #{tpu_custom_call.1} parent=0
    _
  %s8 = ssub.s32 1, %s6
  %s9 = scalar_select 0, %s8, %s6
  $region1: #{tpu_custom_call.1} parent=0
    #allocation2 [shape = 'u8[8192]{0}', space=vmem, size = 0x2000, scoped, tag = 'input window, operand 0, single buffered']
    #allocation3 [shape = 's32[1]{0}', space=sflag, size = 0x4, scoped, tag = 'scoped memory for tpu_custom_call.1']
    #allocation4 [shape = 's32[1]{0}', space=sflag, size = 0x4, scoped, tag = 'scoped memory for tpu_custom_call.1']
    #allocation5 [shape = 'u8[16384]{0}', space=vmem, size = 0x4000, scoped, tag = 'input window, operand 3, single buffered']
    #allocation6 [shape = 's32[1]{0}', space=sflag, size = 0x4, scoped, tag = 'scoped memory for tpu_custom_call.1']
    #allocation7 [shape = 'u8[8192]{0}', space=vmem, size = 0x2000, scoped, tag = 'output window, operand 0, single buffered']
    %10 = vsyncpa [#allocation3], 0
    %11 = vsyncpa [#allocation6], 0
    %12 = vsyncpa [#allocation4], 0
    // Predicated region
    $region2: #{tpu_custom_call.1} parent=1 // pred_check
      _
    $region3: #{tpu_custom_call.1} parent=1 // pred_check_branch
      %14 = sbr.rel (0) target = $region5
    $region4: #{tpu_custom_call.1} parent=1 // pred_region
      %s16 = ssub.s32 256, 256
      %17 = vsyncadd [#allocation3], %s16
      %s18 = sshll.u32 [#allocation2], 4
      %s19 = int_to_ptr.vmem [resolvable:$true] %s18
      %24 = dma.hbm_to_vmem [thread:$0]  %s0, 256, %s19, [#allocation3], 128, 128, 8
    $region5: #{tpu_custom_call.1} parent=1 // pred_fallthru
      _
    // Predicated region
    $region6: #{tpu_custom_call.1} parent=1 // pred_check
      _
    $region7: #{tpu_custom_call.1} parent=1 // pred_check_branch
      %26 = sbr.rel (0) target = $region9
    $region8: #{tpu_custom_call.1} parent=1 // pred_region
      _
    $region9: #{tpu_custom_call.1} parent=1 // pred_fallthru
      _
    // Predicated region
    $region10: #{tpu_custom_call.1} parent=1 // pred_check
      _
    $region11: #{tpu_custom_call.1} parent=1 // pred_check_branch
      %28 = sbr.rel (0) target = $region13
    $region12: #{tpu_custom_call.1} parent=1 // pred_region
      _
    $region13: #{tpu_custom_call.1} parent=1 // pred_fallthru
      _
    // Predicated region
    $region14: #{tpu_custom_call.1} parent=1 // pred_check
      _
    $region15: #{tpu_custom_call.1} parent=1 // pred_check_branch
      %30 = sbr.rel (0) target = $region17
    $region16: #{tpu_custom_call.1} parent=1 // pred_region
      %s32 = ssub.s32 512, 512
      %33 = vsyncadd [#allocation6], %s32
      %s34 = sshll.u32 [#allocation5], 4
      %s35 = int_to_ptr.vmem [resolvable:$true] %s34
      %40 = dma.hbm_to_vmem [thread:$0]  %s3, 512, %s35, [#allocation6], 128, 128, 8
    $region17: #{tpu_custom_call.1} parent=1 // pred_fallthru
      _
    // Predicated region
    $region18: #{tpu_custom_call.1} parent=1 // pred_check
      _
    $region19: #{tpu_custom_call.1} parent=1 // pred_check_branch
      %42 = sbr.rel (0) target = $region21
    $region20: #{tpu_custom_call.1} parent=1 // pred_region
      _
    $region21: #{tpu_custom_call.1} parent=1 // pred_fallthru
      _
    // Predicated region
    $region22: #{tpu_custom_call.1} parent=1 // pred_check
      _
    $region23: #{tpu_custom_call.1} parent=1 // pred_check_branch
      %44 = sbr.rel (0) target = $region25
    $region24: #{tpu_custom_call.1} parent=1 // pred_region
      %45 = dma.done [#allocation3], 256
    $region25: #{tpu_custom_call.1} parent=1 // pred_fallthru
      _
    // Predicated region
    $region26: #{tpu_custom_call.1} parent=1 // pred_check
      _
    $region27: #{tpu_custom_call.1} parent=1 // pred_check_branch
      %47 = sbr.rel (0) target = $region29
    $region28: #{tpu_custom_call.1} parent=1 // pred_region
      %48 = dma.done [#allocation6], 512
    $region29: #{tpu_custom_call.1} parent=1 // pred_fallthru
      _
    %v49 = vld [vmem:[#allocation2] sm:$0xff]
    %v50 = vld [vmem:[#allocation2 + $0x8] sm:$0xff]
    %vm51 = vcmask 261120
    %v52 = vsel %vm51, %v49, 0.0
    %53 = vadd.xlane.f32.xlu0 %v52
    %v54 = vpop.xlane.xlu0 %53
    %v55 = vsel %vm51, %v50, 0.0
    %56 = vadd.xlane.f32.xlu0 %v55
    %v57 = vpop.xlane.xlu0 %56
    %v58 = vmul.f32 %v49, %v49
    %v59 = vmul.f32 %v50, %v50
    %v60 = vsel %vm51, %v58, 0.0
    %61 = vadd.xlane.f32.xlu0 %v60
    %v62 = vpop.xlane.xlu0 %61
    %v63 = vsel %vm51, %v59, 0.0
    %64 = vadd.xlane.f32.xlu0 %v63
    %v65 = vpop.xlane.xlu0 %64
    %v66 = vmul.f32 %v54, 0.03125
    %v67 = vmul.f32 %v57, 0.03125
    %v68 = vmul.f32 %v62, 0.03125
    %v69 = vmul.f32 %v65, 0.03125
    %v70 = vmul.f32 %v66, %v66
    %v71 = vmul.f32 %v67, %v67
    %v72 = vsub.f32 %v68, %v70
    %v73 = vsub.f32 %v69, %v71
    %v74 = vmax.f32 %v72, 0.0
    %v75 = vmax.f32 %v73, 0.0
    %v76 = vsub.f32 %v49, %v66
    %v77 = vsub.f32 %v50, %v67
    %v78 = vadd.f32 %v74, 1e-05
    %v79 = vadd.f32 %v75, 1e-05
    %v80 = vrsqrt.pop %v78
    %v81 = vrsqrt.pop %v79
    %v82 = vmul.f32 %v76, %v80
    %v83 = vmul.f32 %v77, %v81
    %v84 = vld [vmem:[%s1] sm:$0x1]
    %v85 = vld [vmem:[%s2] sm:$0x1]
    %v87 = vlaneseq
    %v88 = vshrl.u32 %v87, 7
    %v89 = vsub.s32 0, %v88
    %v90 = vrot.slane %v84, %v89
    %v92 = vmul.f32 %v82, %v90
    %v93 = vmul.f32 %v83, %v90
    %v95 = vlaneseq
    %v96 = vshrl.u32 %v95, 7
    %v97 = vsub.s32 0, %v96
    %v98 = vrot.slane %v85, %v97
    %v100 = vadd.f32 %v92, %v98
    %v101 = vadd.f32 %v93, %v98
    %v102 = vld [vmem:[#allocation5] sm:$0xff]
    %v103 = vld [vmem:[#allocation5 + $0x8] sm:$0xff]
    %v104 = vld [vmem:[#allocation5 + $0x10] sm:$0xff]
    %v105 = vld [vmem:[#allocation5 + $0x18] sm:$0xff]
    %v106 = vld [vmem:[%s4] sm:$0x1]
    %v108 = vlaneseq
    %v109 = vshrl.u32 %v108, 7
    %v110 = vsub.s32 0, %v109
    %v111 = vrot.slane %v106, %v110
    %v114 = vsel %vm51, %v100, 0
    %v117 = vsel %vm51, %v101, 0
    %119 = vmatprep.subr.mxu0 0.0
    %120 = vmatpush1.msra.mxu0 0.0
    %121 = vmatprep.subr.mxu0 0.0
    %122 = vmatpush1.msra.mxu0 0.0
    %123 = vmatprep.subr.mxu0 0.0
    %124 = vmatpush1.msra.mxu0 0.0
    %125 = vmatprep.subr.mxu0 0.0
    %126 = vmatpush1.msra.mxu0 0.0
    %127 = vmatprep.subr.mxu0 0.0
    %128 = vmatpush1.msra.mxu0 0.0
    %129 = vmatprep.subr.mxu0 0.0
    %130 = vmatpush1.msra.mxu0 0.0
    %131 = vmatprep.subr.mxu0 0.0
    %132 = vmatpush1.msra.mxu0 0.0
    %133 = vmatprep.subr.mxu0 0.0
    %134 = vmatpush1.msra.mxu0 0.0
    %135 = vmatprep.subr.mxu0 0.0
    %136 = vmatpush1.msra.mxu0 0.0
    %137 = vmatprep.subr.mxu0 0.0
    %138 = vmatpush1.msra.mxu0 0.0
    %139 = vmatprep.subr.mxu0 0.0
    %140 = vmatpush1.msra.mxu0 0.0
    %141 = vmatprep.subr.mxu0 0.0
    %142 = vmatpush1.msra.mxu0 0.0
    %143 = vmatprep.subr.mxu0 0.0
    %144 = vmatpush1.msra.mxu0 %v105
    %145 = vmatprep.subr.mxu0 0.0
    %146 = vmatpush1.msra.mxu0 %v104
    %147 = vmatprep.subr.mxu0 0.0
    %148 = vmatpush1.msra.mxu0 %v103
    %149 = vmatprep.subr.mxu0 0.0
    %150 = vmatpush1.msra.mxu0 %v102
    %151 = vmatprep.subr.mxu0 0.0
    %152 = vmatpush2.msra.mxu0 0.0
    %153 = vmatprep.subr.mxu0 0.0
    %154 = vmatpush2.msra.mxu0 0.0
    %155 = vmatprep.subr.mxu0 0.0
    %156 = vmatpush2.msra.mxu0 0.0
    %157 = vmatprep.subr.mxu0 0.0
    %158 = vmatpush2.msra.mxu0 0.0
    %159 = vmatprep.subr.mxu0 0.0
    %160 = vmatpush2.msra.mxu0 0.0
    %161 = vmatprep.subr.mxu0 0.0
    %162 = vmatpush2.msra.mxu0 0.0
    %163 = vmatprep.subr.mxu0 0.0
    %164 = vmatpush2.msra.mxu0 0.0
    %165 = vmatprep.subr.mxu0 0.0
    %166 = vmatpush2.msra.mxu0 0.0
    %167 = vmatprep.subr.mxu0 0.0
    %168 = vmatpush2.msra.mxu0 0.0
    %169 = vmatprep.subr.mxu0 0.0
    %170 = vmatpush2.msra.mxu0 0.0
    %171 = vmatprep.subr.mxu0 0.0
    %172 = vmatpush2.msra.mxu0 0.0
    %173 = vmatprep.subr.mxu0 0.0
    %174 = vmatpush2.msra.mxu0 0.0
    %175 = vmatprep.subr.mxu0 0.0
    %176 = vmatpush2.msra.mxu0 0.0
    %177 = vmatprep.subr.mxu0 0.0
    %178 = vmatpush2.msra.mxu0 0.0
    %179 = vmatprep.subr.mxu0 0.0
    %180 = vmatpush2.msra.mxu0 0.0
    %181 = vmatprep.subr.mxu0 0.0
    %182 = vmatpush2.msra.mxu0 0.0
    %183 = vmatprep.mubr.f32.mxu0 0.0
    %184 = vmatmul.mubr.f32.gmra.mxu0 %v114
    %v185 = vpop.f32.mrf.mxu0
    %v186 = vadd.f32 %v111, %v185
    %v187 = vpop.f32.mrf.mxu0
    %188 = vmatprep.mubr.f32.mxu0 0.0
    %189 = vmatmul.mubr.f32.gmra.mxu0 %v117
    %v190 = vpop.f32.mrf.mxu0
    %v191 = vadd.f32 %v111, %v190
    %v192 = vpop.f32.mrf.mxu0
    %193 = vdwg.mxu0
    %194 = vst [vmem:[#allocation7] sm:$0xff] %v186
    %195 = vst [vmem:[#allocation7 + $0x8] sm:$0xff] %v191
    // Predicated region
    $region30: #{tpu_custom_call.1} parent=1 // pred_check
      _
    $region31: #{tpu_custom_call.1} parent=1 // pred_check_branch
      %197 = sbr.rel (0) target = $region33
    $region32: #{tpu_custom_call.1} parent=1 // pred_region
      %s199 = ssub.s32 256, 256
      %200 = vsyncadd [#allocation4], %s199
      %s201 = sshll.u32 [#allocation7], 4
      %s202 = int_to_ptr.vmem [resolvable:$true] %s201
      %207 = dma.vmem_to_hbm [thread:$0]  %s202, 256, %s5, [#allocation4], 128, 128, 8
    $region33: #{tpu_custom_call.1} parent=1 // pred_fallthru
      _
    // Predicated region
    $region34: #{tpu_custom_call.1} parent=1 // pred_check
      _
    $region35: #{tpu_custom_call.1} parent=1 // pred_check_branch
      %209 = sbr.rel (0) target = $region37
    $region36: #{tpu_custom_call.1} parent=1 // pred_region
      %210 = dma.done [#allocation4], 256
    $region37: #{tpu_custom_call.1} parent=1 // pred_fallthru
      _
    %211 = vsyncpa [#allocation3], 1
    %212 = vsyncpa [#allocation6], 1
    %213 = vsyncpa [#allocation4], 1

</llo_original>
